<compile_context>
chip_gen: v7x
topology: tpu7x:2x2x1
jax: 0.10.0
libtpu: 0.0.40
codegen_flags: <defaults>
</compile_context>

<pallas_src>
import functools
import math

import jax
import jax.numpy as jnp
from jax.experimental import pallas as pl
from jax.experimental.pallas import tpu as pltpu

_LANES = 128
_SUBLANE_TILE = {4: 8, 2: 16, 1: 32}   # itemsize -> minimum sublane tile
_MIN_SPLIT_BYTES = 1 << 20             # only split across cores when >= 1 MiB


# ----------------------------------------------------------------------------
# Activation bodies (evaluated inside the kernel on a VMEM tile)
# ----------------------------------------------------------------------------
def _relu(x):
    return jnp.maximum(x, jnp.asarray(0, dtype=x.dtype))


def _gelu_tanh(x):
    # torch.nn.functional.gelu(x, approximate="tanh")
    c = jnp.asarray(math.sqrt(2.0 / math.pi), dtype=x.dtype)
    a = jnp.asarray(0.044715, dtype=x.dtype)
    half = jnp.asarray(0.5, dtype=x.dtype)
    one = jnp.asarray(1.0, dtype=x.dtype)
    return half * x * (one + jnp.tanh(c * (x + a * x * x * x)))


def _sigmoid(x):
    return jax.nn.sigmoid(x)


def _tanh(x):
    return jnp.tanh(x)


def _silu(x):
    return x * jax.nn.sigmoid(x)


_ACTIVATIONS = {
    "relu": _relu,
    "gelu": _gelu_tanh,
    "sigmoid": _sigmoid,
    "tanh": _tanh,
    "silu": _silu,
}

# (flops per element, transcendentals per element) — advisory only
_ACT_COST = {
    "relu": (1, 0),
    "gelu": (10, 1),
    "sigmoid": (3, 1),
    "tanh": (1, 1),
    "silu": (4, 1),
}


# ----------------------------------------------------------------------------
# Chip-aware defaults
# ----------------------------------------------------------------------------
def _chip_defaults():
    """Block size / core count / bf16-compute availability per TPU generation."""
    try:
        kind = jax.devices()[0].device_kind.lower()
    except Exception:  # pragma: no cover - CPU fallback
        kind = ""
    if "v7" in kind:
        # 3.2 TB/s per TC: 8 MiB blocks amortize per-step overhead; 2 TCs/chip.
        return {"block_bytes": 8 << 20, "n_cores": 2, "bf16_native": True}
    if "v6" in kind:
        return {"block_bytes": 4 << 20, "n_cores": 1, "bf16_native": True}
    if "v5" in kind:
        # v5e: 16 MiB default scoped VMEM and no bf16 VPU/EUP path.
        return {"block_bytes": 2 << 20, "n_cores": 1, "bf16_native": False}
    return {"block_bytes": 4 << 20, "n_cores": 1, "bf16_native": False}


def _compute_dtype(act_name, dtype, bf16_native):
    """Per-activation / per-dtype compute dtype."""
    if act_name == "relu":
        return dtype                      # exact in any dtype, no casts
    if not jnp.issubdtype(dtype, jnp.floating):
        return jnp.float32                # guard: transcendental on ints
    if dtype == jnp.bfloat16:
        return jnp.bfloat16 if bf16_native else jnp.float32
    if dtype == jnp.float16:
        return jnp.float32
    return dtype


def _choose_block_rows(rows, sub_tile, br_cap, n_cores, bytes_per_row):
    """Sublane-aligned block rows giving a balanced, core-divisible grid."""
    if rows <= br_cap:
        # Whole array fits in one block.  On multi-core chips split mid-size
        # arrays so dimension_semantics=("parallel",) shards across TCs.
        if (n_cores > 1 and rows >= n_cores * sub_tile
                and rows * bytes_per_row >= _MIN_SPLIT_BYTES):
            nblk = n_cores
        else:
            return rows, 1                # single full-array block (exempt from (8,128))
    else:
        nblk = pl.cdiv(rows, br_cap)
        if n_cores > 1:
            # Round the program count up to a multiple of the core count so
            # the megacore split is balanced.
            nblk = ((nblk + n_cores - 1) // n_cores) * n_cores
    br = ((pl.cdiv(rows, nblk) + sub_tile - 1) // sub_tile) * sub_tile
    br = max(min(br, br_cap), sub_tile)
    return br, pl.cdiv(rows, br)


# ----------------------------------------------------------------------------
# Pallas kernel
# ----------------------------------------------------------------------------
def _act_kernel(x_ref, o_ref, *, act_fn, compute_dtype):
    x = x_ref[...]
    if x.dtype != compute_dtype:
        x = x.astype(compute_dtype)
    y = act_fn(x)
    # NOTE: for a partial (masked) tail block, garbage values flow through
    # exp/tanh here; this is safe only because Pallas bounds-clamps the output
    # writeback.  Do not remove that masking assumption.
    o_ref[...] = y.astype(o_ref.dtype)


def _run_pallas_bulk(x2d, act_fn, act_name, compute_dtype, br, grid, itemsize):
    rows = x2d.shape[0]
    n_bulk = rows * _LANES
    flops_pe, transc_pe = _ACT_COST.get(act_name, (2, 1))
    cost = pl.CostEstimate(
        flops=flops_pe * n_bulk,
        transcendentals=transc_pe * n_bulk,
        bytes_accessed=2 * n_bulk * itemsize,
    )
    block_bytes = br * _LANES * itemsize
    # 2 operands x 2 pipeline buffers x block + headroom (explicit, so the
    # footprint is independent of the chip's default scoped-VMEM limit).
    vmem_limit = max(4 * block_bytes + (4 << 20), 8 << 20)

    return pl.pallas_call(
        functools.partial(_act_kernel, act_fn=act_fn, compute_dtype=compute_dtype),
        out_shape=jax.ShapeDtypeStruct((rows, _LANES), x2d.dtype),
        grid_spec=pltpu.PrefetchScalarGridSpec(
            num_scalar_prefetch=0,
            grid=grid,
            in_specs=[pl.BlockSpec((br, _LANES), lambda i: (i, 0))],
            out_specs=pl.BlockSpec((br, _LANES), lambda i: (i, 0)),
        ),
        compiler_params=pltpu.CompilerParams(
            dimension_semantics=("parallel",),
            vmem_limit_bytes=int(vmem_limit),
        ),
        cost_estimate=cost,
    )(x2d)


# ----------------------------------------------------------------------------
# Public wrapper (jitted so wrapper reshapes/slices fuse with the kernel)
# ----------------------------------------------------------------------------
@functools.partial(jax.jit, static_argnames=("act_name", "target_block_bytes"))
def pallas_activation(x, act_name="gelu", *, target_block_bytes=None):
    """Elementwise activation applied via a Pallas TPU kernel (any shape)."""
    act_fn = _ACTIVATIONS[act_name]
    cfg = _chip_defaults()
    block_bytes = target_block_bytes if target_block_bytes is not None else cfg["block_bytes"]

    orig_shape = x.shape
    dtype = x.dtype
    itemsize = jnp.dtype(dtype).itemsize
    sub_tile = _SUBLANE_TILE.get(itemsize, 8)
    compute_dtype = _compute_dtype(act_name, dtype, cfg["bf16_native"])

    n = math.prod(orig_shape) if orig_shape else 1
    flat = x.reshape(-1)

    n_bulk = n - (n % _LANES)

    if n_bulk == 0:
        # Entire input is smaller than one lane row — plain jnp, no kernel.
        out_flat = act_fn(flat.astype(compute_dtype)).astype(dtype)
        return out_flat.reshape(orig_shape)

    rows = n_bulk // _LANES
    x2d = flat[:n_bulk].reshape(rows, _LANES)

    br_cap = max(block_bytes // (_LANES * itemsize), sub_tile)
    br_cap = (br_cap // sub_tile) * sub_tile
    br, nprog = _choose_block_rows(rows, sub_tile, br_cap, cfg["n_cores"],
                                   _LANES * itemsize)
    grid = (nprog,)

    out2d = _run_pallas_bulk(x2d, act_fn, act_name, compute_dtype, br, grid, itemsize)
    out_flat = out2d.reshape(-1)

    tail = n - n_bulk
    if tail:
        # <128 leftover elements: compute in plain jnp (costs nothing) instead
        # of a whole-array pad + slice round trip through HBM.
        tail_out = act_fn(flat[n_bulk:].astype(compute_dtype)).astype(dtype)
        out_flat = jnp.concatenate([out_flat, tail_out])

    return out_flat.reshape(orig_shape)


# ----------------------------------------------------------------------------
# test_model equivalent
# ----------------------------------------------------------------------------
class TestModelPallas:
    """JAX/Pallas port of the PyTorch test_model: forward(x) = act_func(x)."""

    def __init__(self, act_name="gelu"):
        self.act_name = act_name

    def __call__(self, x):
        return pallas_activation(x, act_name=self.act_name)


if __name__ == "__main__":
    key = jax.random.PRNGKey(0)
    k1, k2, k3, k4, k5 = jax.random.split(key, 5)

    # 1) Small 1-D activation input (seq=8, hidden=32); n % 128 == 0 -> no tail,
    #    single full-array block.
    x1 = jax.random.normal(k1, (8, 32), dtype=jnp.float32)
    y1 = jax.block_until_ready(TestModelPallas("gelu")(x1))
    ref1 = _gelu_tanh(x1)
    assert y1.shape == x1.shape and y1.dtype == x1.dtype
    assert jnp.max(jnp.abs(y1 - ref1)) < 1e-5

    # 2) Multi-block cdiv grid with a masked tail (tiny block forced for test).
    x2 = jax.random.normal(k2, (41, 128), dtype=jnp.float32)
    y2 = jax.block_until_ready(
        pallas_activation(x2, act_name="relu", target_block_bytes=8 * _LANES * 4)
    )
    assert jnp.max(jnp.abs(y2 - jnp.maximum(x2, 0.0))) == 0.0

    # 3) Unaligned size (n % 128 != 0): kernel on the aligned bulk, jnp tail.
    x3 = jax.random.normal(k3, (3, 100), dtype=jnp.float32)
    y3 = jax.block_until_ready(TestModelPallas("silu")(x3))
    ref3 = x3 * jax.nn.sigmoid(x3)
    assert y3.shape == x3.shape
    assert jnp.max(jnp.abs(y3 - ref3)) < 1e-5

    # 4) bf16 input: native bf16 compute on v6e/v7x, f32 on v5e.
    x4 = jax.random.normal(k4, (16, 256), dtype=jnp.bfloat16)
    y4 = jax.block_until_ready(TestModelPallas("tanh")(x4))
    ref4 = jnp.tanh(x4.astype(jnp.float32)).astype(jnp.bfloat16)
    assert y4.dtype == jnp.bfloat16
    assert jnp.max(jnp.abs(y4.astype(jnp.float32) - ref4.astype(jnp.float32))) < 2e-2

    # 5) 4-D activation input, sigmoid.
    x5 = jax.random.normal(k5, (2, 4, 16, 16), dtype=jnp.float32)
    y5 = jax.block_until_ready(TestModelPallas("sigmoid")(x5))
    ref5 = jax.nn.sigmoid(x5)
    assert y5.shape == x5.shape
    assert jnp.max(jnp.abs(y5 - ref5)) < 1e-5

    print("KERNEL_OK")
</pallas_src>

<mosaic_0001>
module attributes {stable_mosaic.version = 11 : i64} {
  func.func @_act_kernel(%arg0: i32, %arg1: memref<2x128xf32, #tpu.memory_space<vmem>>, %arg2: memref<2x128xf32, #tpu.memory_space<vmem>>) attributes {dimension_semantics = [#tpu.dimension_semantics<parallel>], iteration_bounds = array<i64: 1>, scalar_prefetch = 0 : i64, scratch_operands = 0 : i64, tpu.core_type = #tpu.core_type<tc>, window_params = [{transform_indices = @transform_0, window_bounds = array<i64: 2, 128>}, {transform_indices = @transform_1, window_bounds = array<i64: 2, 128>}]} {
    %c0 = arith.constant 0 : index
    %c0_0 = arith.constant 0 : index
    %0 = vector.load %arg1[%c0, %c0_0] : memref<2x128xf32, #tpu.memory_space<vmem>>, vector<2x128xf32>
    %cst = arith.constant 5.000000e-01 : f32
    %1 = vector.broadcast %cst : f32 to vector<2x128xf32>
    %2 = arith.mulf %1, %0 : vector<2x128xf32>
    %cst_1 = arith.constant 4.471500e-02 : f32
    %3 = vector.broadcast %cst_1 : f32 to vector<2x128xf32>
    %4 = arith.mulf %3, %0 : vector<2x128xf32>
    %5 = arith.mulf %4, %0 : vector<2x128xf32>
    %6 = arith.mulf %5, %0 : vector<2x128xf32>
    %7 = arith.addf %0, %6 : vector<2x128xf32>
    %cst_2 = arith.constant 0.797884583 : f32
    %8 = vector.broadcast %cst_2 : f32 to vector<2x128xf32>
    %9 = arith.mulf %8, %7 : vector<2x128xf32>
    %10 = math.tanh %9 : vector<2x128xf32>
    %cst_3 = arith.constant 1.000000e+00 : f32
    %11 = vector.broadcast %cst_3 : f32 to vector<2x128xf32>
    %12 = arith.addf %11, %10 : vector<2x128xf32>
    %13 = arith.mulf %2, %12 : vector<2x128xf32>
    %c0_4 = arith.constant 0 : index
    %c0_5 = arith.constant 0 : index
    %14 = vector.load %arg2[%c0_4, %c0_5] : memref<2x128xf32, #tpu.memory_space<vmem>>, vector<2x128xf32>
    tpu.vector_store %arg2[%c0_4, %c0_5], %13 {strides = array<i32>} : memref<2x128xf32, #tpu.memory_space<vmem>>, vector<2x128xf32>,
    return
  }
  func.func @transform_0(%arg0: i32) -> (i32, i32) {
    %c0_i32 = arith.constant 0 : i32
    %c0_i32_0 = arith.constant 0 : i32
    return %arg0, %c0_i32 : i32, i32
  }
  func.func @transform_1(%arg0: i32) -> (i32, i32) {
    %c0_i32 = arith.constant 0 : i32
    %c0_i32_0 = arith.constant 0 : i32
    return %arg0, %c0_i32 : i32, i32
  }
}

</mosaic_0001>

<llo_original>
// kernel: pallas_activation.1
$region0: #{pallas_activation.1}
  #allocation0 [shape = 'u32[]', space=smem, size = 0x4, offset = 0x4, fixed_abs, tag = 'smem constant byte address 0x4 - core index']
  #allocation1 [shape = 'u32[144,128]{1,0:T(1,128)}', space=vmem, size = 0x12000, scoped, tag = 'internal scratch']
  %s0 = inlined_call_operand.vmem [shape: f32[2,128], index: 0, kind: input, shape index: {}]
  %s1 = inlined_call_operand.vmem [shape: f32[2,128], index: 1, kind: output, shape index: {}]
  %s2 = sld [smem:[#allocation0]]
  $region14: #{pallas_activation.1} parent=0
    _
  %s4 = ssub.s32 1, %s2
  %s5 = scalar_select 0, %s4, %s2
  // Predicated region
  $region2: #{pallas_activation.1} parent=0 // pred_check
    _
  $region3: #{pallas_activation.1} parent=0 // pred_check_branch
    %7 = sbr.rel (0) target = $region5
  $region4: #{pallas_activation.1} parent=0 // pred_region
    _
  $region5: #{pallas_activation.1} parent=0 // pred_fallthru
    _
  %v8 = vld [vmem:[%s0] sm:$0x3]
  %v9 = vmul.f32 %v8, 0.5
  %v10 = vmul.f32 %v8, 0.044715
  %v11 = vmul.f32 %v10, %v8
  %v12 = vmul.f32 %v11, %v8
  %v13 = vadd.f32 %v8, %v12
  %v14 = vmul.f32 %v13, 0.7978846
  %v15 = vtanh.pop %v14
  %v16 = vadd.f32 %v15, 1.0
  %v17 = vmul.f32 %v9, %v16
  %18 = vst [vmem:[%s1] sm:$0x3] %v17
  // Predicated region
  $region6: #{pallas_activation.1} parent=0 // pred_check
    _
  $region7: #{pallas_activation.1} parent=0 // pred_check_branch
    %20 = sbr.rel (0) target = $region9
  $region8: #{pallas_activation.1} parent=0 // pred_region
    _
  $region9: #{pallas_activation.1} parent=0 // pred_fallthru
    _
  // Predicated region
  $region10: #{pallas_activation.1} parent=0 // pred_check
    _
  $region11: #{pallas_activation.1} parent=0 // pred_check_branch
    %22 = sbr.rel (0) target = $region13
  $region12: #{pallas_activation.1} parent=0 // pred_region
    _
  $region13: #{pallas_activation.1} parent=0 // pred_fallthru
    _

</llo_original>
